<compile_context>
chip_gen: v7x
topology: tpu7x:2x2x1
jax: 0.10.0
libtpu: 0.0.40
codegen_flags: <defaults>
</compile_context>

<pallas_src>
import functools

import numpy as np
import jax
import jax.numpy as jnp
from jax.experimental import pallas as pl
from jax.experimental.pallas import tpu as pltpu

EMBED_DIM = 32
NUM_HEADS = 4
HEAD_DIM = EMBED_DIM // NUM_HEADS
NUM_PERSPECTIVES = 4
ENTROPY_THRESHOLD = 0.8
ENTROPY_HIDDEN = 128
MIRROR_WEIGHT = 0.7

# whole-array-in-VMEM BlockSpec (KB-scale operands -> no grid / tiling needed,
# and per the review no dimension_semantics / multi-core splitting either)
_VMEM = functools.partial(pl.BlockSpec, memory_space=pltpu.MemorySpace.VMEM)


def _round_up(n, m=8):
    return max(m, ((n + m - 1) // m) * m)


# ----------------------------------------------------------------------------
# Kernel 1: EntropyPredictor MLP on the stacked inputs  [Np, 2E] -> [Np, 1]
# ----------------------------------------------------------------------------
def _entropy_mlp_kernel(x_ref, w1_ref, b1_ref, w2_ref, b2_ref, w3row_ref, b3_ref, o_ref):
    x = x_ref[...]
    h = jnp.maximum(jnp.dot(x, w1_ref[...], preferred_element_type=jnp.float32) + b1_ref[...], 0.0)
    h = jnp.maximum(jnp.dot(h, w2_ref[...], preferred_element_type=jnp.float32) + b2_ref[...], 0.0)
    # final [hidden -> 1] projection as VPU multiply + lane reduce (avoid N=1 MXU matmul)
    logits = jnp.sum(h * w3row_ref[...], axis=1, keepdims=True) + b3_ref[...]
    o_ref[...] = jax.nn.sigmoid(logits)


def entropy_mlp(x, p):
    n = x.shape[0]
    npad = _round_up(n)
    if npad != n:
        x = jnp.concatenate([x, jnp.zeros((npad - n, x.shape[1]), x.dtype)], axis=0)
    w3_row = p["w3"].reshape(1, -1)  # [1, hidden]
    args = (x, p["w1"], p["b1"], p["w2"], p["b2"], w3_row, p["b3"])
    out = pl.pallas_call(
        _entropy_mlp_kernel,
        out_shape=jax.ShapeDtypeStruct((npad, 1), jnp.float32),
        in_specs=[_VMEM() for _ in args],
        out_specs=_VMEM(),
    )(*args)
    return out[:n]


# ----------------------------------------------------------------------------
# Kernel 2: fused CrossAttention + 4 Q-networks
#   self_p / other_p : [Pp, E]   (query / key-value patches, Pp = P padded to 8)
#   an               : [2Pp, E]  (action rows stacked on top of no-action rows)
#   output           : [Pp, NUM_PERSPECTIVES]  per-patch  Q_i(s,a) - Q_i(s,\emptyset)
# ----------------------------------------------------------------------------
def _fused_attn_q_kernel(selfp_ref, otherp_ref, an_ref,
                         wq_ref, bq_ref, wk_ref, bk_ref, wv_ref, bv_ref, wo_ref, bo_ref,
                         w1a_ref, w1b_ref, b1p_ref, w2bd_ref, b2p_ref,
                         o_ref, *, num_heads, head_dim):
    f32 = jnp.float32
    pp = selfp_ref.shape[0]
    e = num_heads * head_dim

    # --- CrossAttention: query = self patches, key/value = other patches.
    #     TOVA kv-cache is empty before this (single) forward call -> kv length 1.
    q = jnp.dot(selfp_ref[...], wq_ref[...], preferred_element_type=f32) + bq_ref[...]
    k = jnp.dot(otherp_ref[...], wk_ref[...], preferred_element_type=f32) + bk_ref[...]
    v = jnp.dot(otherp_ref[...], wv_ref[...], preferred_element_type=f32) + bv_ref[...]

    # Per-head q.k dot products, vectorized over heads with head-indicator matmuls
    # (no per-head Python loop, no lane-masked scratch stores).
    lane = jax.lax.broadcasted_iota(jnp.int32, (e, num_heads), 0)
    head = jax.lax.broadcasted_iota(jnp.int32, (e, num_heads), 1)
    seg = (lane // head_dim == head).astype(f32)                       # [E, H]
    head_t = jax.lax.broadcasted_iota(jnp.int32, (num_heads, e), 0)
    lane_t = jax.lax.broadcasted_iota(jnp.int32, (num_heads, e), 1)
    seg_t = (lane_t // head_dim == head_t).astype(f32)                 # [H, E]

    scale = 1.0 / float(head_dim) ** 0.5
    scores = jnp.dot(q * k, seg, preferred_element_type=f32) * scale   # [Pp, H]
    # StableMax: s(x) = x+1 (x>=0) else 1/(1-x), normalized over the kv axis.
    g = jnp.where(scores >= 0.0, scores + 1.0, 1.0 / (1.0 - scores))
    attn_w = g / g  # kv axis has a single entry -> denominator == g (weights == 1)
    # dropout(0.1) on attn_w is identity in eval mode (TODO(synk) above)
    ctx = jnp.dot(attn_w, seg_t, preferred_element_type=f32) * v       # [Pp, E]
    enh = jnp.dot(ctx, wo_ref[...], preferred_element_type=f32) + bo_ref[...]

    # --- 4 Q-networks: perspectives packed along lanes, action/no-action stacked
    #     along M.  cat([enh, a]) @ W1p == enh @ W1p_top + a @ W1p_bot, so the
    #     "enhanced" half is projected once and reused for both row groups.
    h_enh = jnp.dot(enh, w1a_ref[...], preferred_element_type=f32)           # [Pp, 4E]
    h_an = jnp.dot(an_ref[...], w1b_ref[...], preferred_element_type=f32)    # [2Pp, 4E]
    h = jnp.maximum(jnp.concatenate([h_enh, h_enh], axis=0) + h_an + b1p_ref[...], 0.0)
    qv = jnp.dot(h, w2bd_ref[...], preferred_element_type=f32) + b2p_ref[...]  # [2Pp, NP]
    o_ref[...] = qv[:pp] - qv[pp:]   # per-patch, per-perspective Q(s,a) - Q(s, no-op)


def fused_attention_q(self_p, other_p, act_p, noact_p, attn, q):
    p_count = self_p.shape[0]
    pp = _round_up(p_count)

    def pad(x):
        x = np.asarray(x, np.float32)
        if x.shape[0] == pp:
            return x
        out = np.zeros((pp, x.shape[1]), np.float32)
        out[: x.shape[0]] = x
        return out

    selfp = jnp.asarray(pad(self_p))
    otherp = jnp.asarray(pad(other_p))
    an = jnp.asarray(np.concatenate([pad(act_p), pad(noact_p)], axis=0))   # [2Pp, E]

    e = EMBED_DIM
    # Pack the 4 perspective Q-nets: first layer -> [2E, 4E], second -> block-diag [4E, 4].
    w1p = jnp.concatenate([q["w1"][i] for i in range(NUM_PERSPECTIVES)], axis=1)   # [2E, 4E]
    w1a, w1b = w1p[:e], w1p[e:]
    b1p = jnp.concatenate([q["b1"][i] for i in range(NUM_PERSPECTIVES)], axis=1)   # [1, 4E]
    w2bd = jnp.zeros((NUM_PERSPECTIVES * e, NUM_PERSPECTIVES), jnp.float32)
    for i in range(NUM_PERSPECTIVES):
        w2bd = w2bd.at[i * e:(i + 1) * e, i].set(q["w2"][i][:, 0])
    b2p = jnp.concatenate([q["b2"][i] for i in range(NUM_PERSPECTIVES)], axis=1)   # [1, NP]

    args = (selfp, otherp, an,
            attn["wq"], attn["bq"], attn["wk"], attn["bk"],
            attn["wv"], attn["bv"], attn["wo"], attn["bo"],
            w1a, w1b, b1p, w2bd, b2p)
    kernel = functools.partial(_fused_attn_q_kernel, num_heads=NUM_HEADS, head_dim=HEAD_DIM)
    out = pl.pallas_call(
        kernel,
        out_shape=jax.ShapeDtypeStruct((pp, NUM_PERSPECTIVES), jnp.float32),
        in_specs=[_VMEM() for _ in args],
        out_specs=_VMEM(),
    )(*args)
    return out[:p_count]


# ----------------------------------------------------------------------------
# Pure-JAX references (correctness check only)
# ----------------------------------------------------------------------------
def _ref_entropy(x, p):
    h = jax.nn.relu(x @ p["w1"] + p["b1"])
    h = jax.nn.relu(h @ p["w2"] + p["b2"])
    return jax.nn.sigmoid(h @ p["w3"] + p["b3"])


def _ref_cross_attention(query, key_value, p):
    n, e = query.shape
    q = (query @ p["wq"] + p["bq"]).reshape(n, NUM_HEADS, HEAD_DIM)
    k = (key_value @ p["wk"] + p["bk"]).reshape(n, NUM_HEADS, HEAD_DIM)
    v = (key_value @ p["wv"] + p["bv"]).reshape(n, NUM_HEADS, HEAD_DIM)
    scores = jnp.sum(q * k, axis=-1, keepdims=True) / float(HEAD_DIM) ** 0.5   # kv length 1
    g = jnp.where(scores >= 0.0, scores + 1.0, 1.0 / (1.0 - scores))
    w = g / jnp.sum(g, axis=-1, keepdims=True)
    ctx = (w * v).reshape(n, e)
    return ctx @ p["wo"] + p["bo"]


def _ref_q_diffs(enh, act, noact, p):
    xa = jnp.concatenate([enh, act], axis=1)
    xn = jnp.concatenate([enh, noact], axis=1)
    diffs = []
    for i in range(NUM_PERSPECTIVES):
        qa = jax.nn.relu(xa @ p["w1"][i] + p["b1"][i]) @ p["w2"][i] + p["b2"][i]
        qn = jax.nn.relu(xn @ p["w1"][i] + p["b1"][i]) @ p["w2"][i] + p["b2"][i]
        diffs.append(qa - qn)
    return jnp.concatenate(diffs, axis=1)   # [P, NUM_PERSPECTIVES]


# ----------------------------------------------------------------------------
# Host-side glue: dynamic patching (data-dependent shapes) and aggregation
# ----------------------------------------------------------------------------
def dynamic_patching_host(states, actions, entropies, threshold):
    b, s, _ = states.shape
    mask = entropies > threshold  # [B, S]
    patched_states, patched_actions, patch_indices = [], [], []
    for bb in range(b):
        boundaries = list(np.nonzero(mask[bb])[0])
        if len(boundaries) == 0 or boundaries[-1] != s - 1:
            boundaries.append(s - 1)
        start = 0
        for end in boundaries:
            end = int(end)
            patched_states.append(states[bb, start:end + 1].mean(axis=0))
            patched_actions.append(actions[bb, start:end + 1].mean(axis=0))
            patch_indices.append((bb, start, end))
            start = end + 1
    return (np.stack(patched_states).astype(np.float32),
            np.stack(patched_actions).astype(np.float32),
            patch_indices)


def mirror_neuron_empathy_forward(params, self_state, other_state, action, no_action=None,
                                  apply_dynamic_patching=True, use_pallas=True):
    self_state = jnp.asarray(self_state, jnp.float32)
    other_state = jnp.asarray(other_state, jnp.float32)
    action = jnp.asarray(action, jnp.float32)
    b, s, e = self_state.shape
    if no_action is None:
        no_action = jnp.zeros_like(action)
    else:
        no_action = jnp.asarray(no_action, jnp.float32)

    if apply_dynamic_patching:
        # ONE entropy launch for both (self,action) and (other,no_action) pairs,
        # followed by a single device->host transfer for the boundary decision.
        x_self = jnp.concatenate([self_state, action], axis=2).reshape(b * s, 2 * e)
        x_other = jnp.concatenate([other_state, no_action], axis=2).reshape(b * s, 2 * e)
        x_ent = jnp.concatenate([x_self, x_other], axis=0)
        ent = entropy_mlp(x_ent, params["entropy"]) if use_pallas \
            else _ref_entropy(x_ent, params["entropy"])
        ent = np.asarray(ent)[:, 0]
        ent_self = ent[: b * s].reshape(b, s)
        ent_other = ent[b * s:].reshape(b, s)

        st_np, ot_np, ac_np, na_np = map(np.asarray, (self_state, other_state, action, no_action))
        self_p, act_p, self_idx = dynamic_patching_host(st_np, ac_np, ent_self, ENTROPY_THRESHOLD)
        other_p, noact_p, _ = dynamic_patching_host(ot_np, na_np, ent_other, ENTROPY_THRESHOLD)
        if self_p.shape[0] != other_p.shape[0]:
            raise ValueError("patch count mismatch between (self,action) and (other,no_action); "
                             "the PyTorch module would also fail here")
    else:
        self_p = np.asarray(self_state).reshape(-1, e)
        act_p = np.asarray(action).reshape(-1, e)
        other_p = np.asarray(other_state).reshape(-1, e)
        noact_p = np.asarray(no_action).reshape(-1, e)
        self_idx = None

    if use_pallas:
        diffs = np.asarray(fused_attention_q(self_p, other_p, act_p, noact_p,
                                             params["attn"], params["q"]))
    else:
        enh = _ref_cross_attention(jnp.asarray(self_p), jnp.asarray(other_p), params["attn"])
        diffs = np.asarray(_ref_q_diffs(enh, jnp.asarray(act_p), jnp.asarray(noact_p),
                                        params["q"]))

    empathy = diffs.mean(axis=1)   # mean over perspectives -> [P]

    # TODO(synk): per-batch aggregation over a data-dependent patch->batch mapping is host-side.
    if apply_dynamic_patching:
        agg = np.zeros((b,), np.float32)
        for bb in range(b):
            vals = [empathy[i] for i, (pb, _, _) in enumerate(self_idx) if pb == bb]
            agg[bb] = float(np.mean(vals)) if vals else 0.0
    else:
        agg = empathy.reshape(b, -1).mean(axis=1)

    return jnp.asarray(MIRROR_WEIGHT * agg, jnp.float32).reshape(b, 1)


# ----------------------------------------------------------------------------
# Deterministic parameter init (shapes match the PyTorch module)
# ----------------------------------------------------------------------------
def init_params(key):
    e = EMBED_DIM
    h = ENTROPY_HIDDEN
    ks = jax.random.split(key, 16)

    def nrm(kk, shape, scale):
        return (scale * jax.random.normal(kk, shape)).astype(jnp.float32)

    attn = {
        "wq": nrm(ks[0], (e, e), 0.1), "bq": nrm(ks[1], (1, e), 0.05),
        "wk": nrm(ks[2], (e, e), 0.1), "bk": nrm(ks[3], (1, e), 0.05),
        "wv": nrm(ks[4], (e, e), 0.1), "bv": nrm(ks[5], (1, e), 0.05),
        "wo": nrm(ks[6], (e, e), 0.1), "bo": nrm(ks[7], (1, e), 0.05),
    }
    entropy = {
        "w1": nrm(ks[8], (2 * e, h), 0.02), "b1": jnp.zeros((1, h), jnp.float32),
        "w2": nrm(ks[9], (h, h), 0.02), "b2": jnp.zeros((1, h), jnp.float32),
        "w3": nrm(ks[10], (h, 1), 0.02), "b3": jnp.zeros((1, 1), jnp.float32),
    }
    gain = 0.01  # xavier_normal_(gain=0.01), zero biases, as in the module
    std1 = gain * (2.0 / (2 * e + e)) ** 0.5
    std2 = gain * (2.0 / (e + 1)) ** 0.5
    q = {
        "w1": nrm(ks[11], (NUM_PERSPECTIVES, 2 * e, e), std1),
        "b1": jnp.zeros((NUM_PERSPECTIVES, 1, e), jnp.float32),
        "w2": nrm(ks[12], (NUM_PERSPECTIVES, e, 1), std2),
        "b2": jnp.zeros((NUM_PERSPECTIVES, 1, 1), jnp.float32),
    }
    return {"attn": attn, "entropy": entropy, "q": q}


if __name__ == "__main__":
    key = jax.random.PRNGKey(0)
    pkey, k1, k2, k3 = jax.random.split(key, 4)
    params = init_params(pkey)

    B, S = 2, 8
    self_state = jax.random.normal(k1, (B, S, EMBED_DIM), jnp.float32)
    other_state = jax.random.normal(k2, (B, S, EMBED_DIM), jnp.float32)
    action = jax.random.normal(k3, (B, S, EMBED_DIM), jnp.float32)

    out = mirror_neuron_empathy_forward(params, self_state, other_state, action,
                                        apply_dynamic_patching=True, use_pallas=True)
    out = jax.block_until_ready(out)
    assert out.shape == (B, 1)

    with jax.default_matmul_precision("float32"):
        ref = jax.block_until_ready(
            mirror_neuron_empathy_forward(params, self_state, other_state, action,
                                          apply_dynamic_patching=True, use_pallas=False))
    np.testing.assert_allclose(np.asarray(out), np.asarray(ref), rtol=2e-2, atol=5e-6)

    print("KERNEL_OK")
</pallas_src>

<mosaic_0001>
module attributes {stable_mosaic.version = 11 : i64} {
  func.func @_entropy_mlp_kernel(%arg0: memref<32x64xf32, #tpu.memory_space<vmem>>, %arg1: memref<64x128xf32, #tpu.memory_space<vmem>>, %arg2: memref<1x128xf32, #tpu.memory_space<vmem>>, %arg3: memref<128x128xf32, #tpu.memory_space<vmem>>, %arg4: memref<1x128xf32, #tpu.memory_space<vmem>>, %arg5: memref<1x128xf32, #tpu.memory_space<vmem>>, %arg6: memref<1x1xf32, #tpu.memory_space<vmem>>, %arg7: memref<32x1xf32, #tpu.memory_space<vmem>>) attributes {dimension_semantics = [], scalar_prefetch = 0 : i64, scratch_operands = 0 : i64, tpu.core_type = #tpu.core_type<tc>} {
    %c0 = arith.constant 0 : index
    %c0_0 = arith.constant 0 : index
    %0 = vector.load %arg0[%c0, %c0_0] : memref<32x64xf32, #tpu.memory_space<vmem>>, vector<32x64xf32>
    %c0_1 = arith.constant 0 : index
    %c0_2 = arith.constant 0 : index
    %1 = vector.load %arg1[%c0_1, %c0_2] : memref<64x128xf32, #tpu.memory_space<vmem>>, vector<64x128xf32>
    %cst = arith.constant dense<0.000000e+00> : vector<32x128xf32>
    %2 = tpu.matmul %0, %1, %cst {dimension_numbers = #tpu.dot_dimension_numbers<[1], [0], [0], [1], [0, 0, 1, 1], [], []>} : vector<32x64xf32>, vector<64x128xf32>, vector<32x128xf32> -> vector<32x128xf32>
    %c0_3 = arith.constant 0 : index
    %c0_4 = arith.constant 0 : index
    %3 = vector.load %arg2[%c0_3, %c0_4] : memref<1x128xf32, #tpu.memory_space<vmem>>, vector<1x128xf32>
    %4 = vector.broadcast %3 : vector<1x128xf32> to vector<32x128xf32>
    %5 = arith.addf %2, %4 : vector<32x128xf32>
    %cst_5 = arith.constant 0.000000e+00 : f32
    %6 = vector.broadcast %cst_5 : f32 to vector<32x128xf32>
    %7 = arith.maximumf %5, %6 : vector<32x128xf32>
    %c0_6 = arith.constant 0 : index
    %c0_7 = arith.constant 0 : index
    %8 = vector.load %arg3[%c0_6, %c0_7] : memref<128x128xf32, #tpu.memory_space<vmem>>, vector<128x128xf32>
    %cst_8 = arith.constant dense<0.000000e+00> : vector<32x128xf32>
    %9 = tpu.matmul %7, %8, %cst_8 {dimension_numbers = #tpu.dot_dimension_numbers<[1], [0], [0], [1], [0, 0, 1, 1], [], []>} : vector<32x128xf32>, vector<128x128xf32>, vector<32x128xf32> -> vector<32x128xf32>
    %c0_9 = arith.constant 0 : index
    %c0_10 = arith.constant 0 : index
    %10 = vector.load %arg4[%c0_9, %c0_10] : memref<1x128xf32, #tpu.memory_space<vmem>>, vector<1x128xf32>
    %11 = vector.broadcast %10 : vector<1x128xf32> to vector<32x128xf32>
    %12 = arith.addf %9, %11 : vector<32x128xf32>
    %cst_11 = arith.constant 0.000000e+00 : f32
    %13 = vector.broadcast %cst_11 : f32 to vector<32x128xf32>
    %14 = arith.maximumf %12, %13 : vector<32x128xf32>
    %c0_12 = arith.constant 0 : index
    %c0_13 = arith.constant 0 : index
    %15 = vector.load %arg5[%c0_12, %c0_13] : memref<1x128xf32, #tpu.memory_space<vmem>>, vector<1x128xf32>
    %16 = vector.broadcast %15 : vector<1x128xf32> to vector<32x128xf32>
    %17 = arith.mulf %14, %16 : vector<32x128xf32>
    %cst_14 = arith.constant dense<0.000000e+00> : vector<32xf32>
    %18 = vector.multi_reduction <add>, %17, %cst_14 [1] : vector<32x128xf32> to vector<32xf32>
    %19 = vector.shape_cast %18 : vector<32xf32> to vector<32x1xf32>
    %c0_15 = arith.constant 0 : index
    %c0_16 = arith.constant 0 : index
    %20 = vector.load %arg6[%c0_15, %c0_16] : memref<1x1xf32, #tpu.memory_space<vmem>>, vector<1x1xf32>
    %21 = vector.broadcast %20 : vector<1x1xf32> to vector<32x1xf32>
    %22 = arith.addf %19, %21 : vector<32x1xf32>
    %23 = arith.negf %22 : vector<32x1xf32>
    %24 = math.exp %23 : vector<32x1xf32>
    %cst_17 = arith.constant 1.000000e+00 : f32
    %25 = vector.broadcast %cst_17 : f32 to vector<32x1xf32>
    %26 = arith.addf %25, %24 : vector<32x1xf32>
    %27 = arith.divf %25, %26 : vector<32x1xf32>
    %c0_18 = arith.constant 0 : index
    %c0_19 = arith.constant 0 : index
    %28 = vector.load %arg7[%c0_18, %c0_19] : memref<32x1xf32, #tpu.memory_space<vmem>>, vector<32x1xf32>
    tpu.vector_store %arg7[%c0_18, %c0_19], %27 {strides = array<i32>} : memref<32x1xf32, #tpu.memory_space<vmem>>, vector<32x1xf32>,
    return
  }
}

</mosaic_0001>

<llo_original>
// kernel: tpu_custom_call.1
$region0: #{tpu_custom_call.1}
  #allocation0 [shape = 'u32[]', space=smem, size = 0x4, offset = 0x4, fixed_abs, tag = 'smem constant byte address 0x4 - core index']
  #allocation1 [shape = 'u32[144,128]{1,0:T(1,128)}', space=vmem, size = 0x12000, scoped, tag = 'internal scratch']
  #allocation2 [shape = 'f32[1,1]{1,0:T(1,128)S(1)}', space=vmem, size = 0x200, scoped, tag = 'scoped memory for tpu_custom_call.1']
  %s0 = inlined_call_operand.hbm [shape: f32[32,64], index: 0, kind: input, shape index: {}]
  %s1 = inlined_call_operand.hbm [shape: f32[64,128], index: 1, kind: input, shape index: {}]
  %s2 = inlined_call_operand.vmem [shape: f32[1,128], index: 2, kind: input, shape index: {}]
  %s3 = inlined_call_operand.hbm [shape: f32[128,128], index: 3, kind: input, shape index: {}]
  %s4 = inlined_call_operand.vmem [shape: f32[1,128], index: 4, kind: input, shape index: {}]
  %s5 = inlined_call_operand.vmem [shape: f32[1,128], index: 5, kind: input, shape index: {}]
  %s6 = inlined_call_operand.<no memory space> [shape: f32[1,1], index: 6, kind: input, shape index: {}]
  %s7 = inlined_call_operand.vmem [shape: f32[32,1], index: 7, kind: output, shape index: {}]
  %s8 = sld [smem:[#allocation0]]
  $region50: #{tpu_custom_call.1} parent=0
    _
  %s10 = ssub.s32 1, %s8
  %s11 = scalar_select 0, %s10, %s8
  %v12 = vstv %s6
  %13 = vst [vmem:[#allocation2] sm:$0x1] %v12
  $region1: #{tpu_custom_call.1} parent=0
    #allocation3 [shape = 'u8[16384]{0}', space=vmem, size = 0x4000, scoped, tag = 'input window, operand 0, single buffered']
    #allocation4 [shape = 's32[1]{0}', space=sflag, size = 0x4, scoped, tag = 'scoped memory for tpu_custom_call.1']
    #allocation5 [shape = 'u8[32768]{0}', space=vmem, size = 0x8000, scoped, tag = 'input window, operand 1, single buffered']
    #allocation6 [shape = 's32[1]{0}', space=sflag, size = 0x4, scoped, tag = 'scoped memory for tpu_custom_call.1']
    #allocation7 [shape = 'u8[65536]{0}', space=vmem, size = 0x10000, scoped, tag = 'input window, operand 3, single buffered']
    %14 = vsyncpa [#allocation4], 0
    %15 = vsyncpa [#allocation6], 0
    // Predicated region
    $region2: #{tpu_custom_call.1} parent=1 // pred_check
      _
    $region3: #{tpu_custom_call.1} parent=1 // pred_check_branch
      %17 = sbr.rel (0) target = $region5
    $region4: #{tpu_custom_call.1} parent=1 // pred_region
      %s19 = ssub.s32 512, 512
      %20 = vsyncadd [#allocation4], %s19
      %s21 = sshll.u32 [#allocation3], 4
      %s22 = int_to_ptr.vmem [resolvable:$true] %s21
      %27 = dma.hbm_to_vmem [thread:$0]  %s0, 512, %s22, [#allocation4], 128, 128, 8
    $region5: #{tpu_custom_call.1} parent=1 // pred_fallthru
      _
    // Predicated region
    $region6: #{tpu_custom_call.1} parent=1 // pred_check
      _
    $region7: #{tpu_custom_call.1} parent=1 // pred_check_branch
      %29 = sbr.rel (0) target = $region9
    $region8: #{tpu_custom_call.1} parent=1 // pred_region
      %s31 = ssub.s32 1024, 1024
      %32 = vsyncadd [#allocation6], %s31
      %s33 = sshll.u32 [#allocation5], 4
      %s34 = int_to_ptr.vmem [resolvable:$true] %s33
      %39 = dma.hbm_to_vmem [thread:$0]  %s1, 1024, %s34, [#allocation6], 128, 128, 8
    $region9: #{tpu_custom_call.1} parent=1 // pred_fallthru
      _
    // Predicated region
    $region10: #{tpu_custom_call.1} parent=1 // pred_check
      _
    $region11: #{tpu_custom_call.1} parent=1 // pred_check_branch
      %41 = sbr.rel (0) target = $region13
    $region12: #{tpu_custom_call.1} parent=1 // pred_region
      _
    $region13: #{tpu_custom_call.1} parent=1 // pred_fallthru
      _
    // Predicated region
    $region14: #{tpu_custom_call.1} parent=1 // pred_check
      _
    $region15: #{tpu_custom_call.1} parent=1 // pred_check_branch
      %43 = sbr.rel (0) target = $region17
    $region16: #{tpu_custom_call.1} parent=1 // pred_region
      %s45 = ssub.s32 2048, 2048
      %46 = vsyncadd [#allocation6], %s45
      %s47 = sshll.u32 [#allocation7], 4
      %s48 = int_to_ptr.vmem [resolvable:$true] %s47
      %53 = dma.hbm_to_vmem [thread:$0]  %s3, 2048, %s48, [#allocation6], 128, 128, 8
    $region17: #{tpu_custom_call.1} parent=1 // pred_fallthru
      _
    // Predicated region
    $region18: #{tpu_custom_call.1} parent=1 // pred_check
      _
    $region19: #{tpu_custom_call.1} parent=1 // pred_check_branch
      %55 = sbr.rel (0) target = $region21
    $region20: #{tpu_custom_call.1} parent=1 // pred_region
      _
    $region21: #{tpu_custom_call.1} parent=1 // pred_fallthru
      _
    // Predicated region
    $region22: #{tpu_custom_call.1} parent=1 // pred_check
      _
    $region23: #{tpu_custom_call.1} parent=1 // pred_check_branch
      %57 = sbr.rel (0) target = $region25
    $region24: #{tpu_custom_call.1} parent=1 // pred_region
      _
    $region25: #{tpu_custom_call.1} parent=1 // pred_fallthru
      _
    // Predicated region
    $region26: #{tpu_custom_call.1} parent=1 // pred_check
      _
    $region27: #{tpu_custom_call.1} parent=1 // pred_check_branch
      %59 = sbr.rel (0) target = $region29
    $region28: #{tpu_custom_call.1} parent=1 // pred_region
      _
    $region29: #{tpu_custom_call.1} parent=1 // pred_fallthru
      _
    // Predicated region
    $region30: #{tpu_custom_call.1} parent=1 // pred_check
      _
    $region31: #{tpu_custom_call.1} parent=1 // pred_check_branch
      %61 = sbr.rel (0) target = $region33
    $region32: #{tpu_custom_call.1} parent=1 // pred_region
      %62 = dma.done [#allocation4], 512
    $region33: #{tpu_custom_call.1} parent=1 // pred_fallthru
      _
    // Predicated region
    $region34: #{tpu_custom_call.1} parent=1 // pred_check
      _
    $region35: #{tpu_custom_call.1} parent=1 // pred_check_branch
      %64 = sbr.rel (0) target = $region37
    $region36: #{tpu_custom_call.1} parent=1 // pred_region
      %65 = dma.done [#allocation6], 1024
    $region37: #{tpu_custom_call.1} parent=1 // pred_fallthru
      _
    // Predicated region
    $region38: #{tpu_custom_call.1} parent=1 // pred_check
      _
    $region39: #{tpu_custom_call.1} parent=1 // pred_check_branch
      %67 = sbr.rel (0) target = $region41
    $region40: #{tpu_custom_call.1} parent=1 // pred_region
      %68 = dma.done [#allocation6], 2048
    $region41: #{tpu_custom_call.1} parent=1 // pred_fallthru
      _
    %v69 = vld [vmem:[#allocation3] sm:$0xff]
    %v70 = vld [vmem:[#allocation3 + $0x8] sm:$0xff]
    %v71 = vld [vmem:[#allocation3 + $0x10] sm:$0xff]
    %v72 = vld [vmem:[#allocation3 + $0x18] sm:$0xff]
    %v73 = vld [vmem:[#allocation5] sm:$0xff]
    %v74 = vld [vmem:[#allocation5 + $0x8] sm:$0xff]
    %v75 = vld [vmem:[#allocation5 + $0x10] sm:$0xff]
    %v76 = vld [vmem:[#allocation5 + $0x18] sm:$0xff]
    %v77 = vld [vmem:[#allocation5 + $0x20] sm:$0xff]
    %v78 = vld [vmem:[#allocation5 + $0x28] sm:$0xff]
    %v79 = vld [vmem:[#allocation5 + $0x30] sm:$0xff]
    %v80 = vld [vmem:[#allocation5 + $0x38] sm:$0xff]
    %v81 = vld [vmem:[%s2] sm:$0x1]
    %v83 = vlaneseq
    %v84 = vshrl.u32 %v83, 7
    %v85 = vsub.s32 0, %v84
    %v86 = vrot.slane %v81, %v85
    %vm88 = vcmask 523264
    %v90 = vsel %vm88, %v69, 0
    %v93 = vsel %vm88, %v70, 0
    %v96 = vsel %vm88, %v71, 0
    %v99 = vsel %vm88, %v72, 0
    %101 = vmatprep.subr.mxu0 0.0
    %102 = vmatpush1.msra.mxu0 %v73
    %103 = vmatprep.subr.mxu0 0.0
    %104 = vmatpush1.msra.mxu0 %v74
    %105 = vmatprep.subr.mxu0 0.0
    %106 = vmatpush1.msra.mxu0 %v75
    %107 = vmatprep.subr.mxu0 0.0
    %108 = vmatpush1.msra.mxu0 %v76
    %109 = vmatprep.subr.mxu0 0.0
    %110 = vmatpush1.msra.mxu0 %v77
    %111 = vmatprep.subr.mxu0 0.0
    %112 = vmatpush1.msra.mxu0 %v78
    %113 = vmatprep.subr.mxu0 0.0
    %114 = vmatpush1.msra.mxu0 %v79
    %115 = vmatprep.subr.mxu0 0.0
    %116 = vmatpush1.msra.mxu0 %v80
    %117 = vmatprep.subr.mxu0 0.0
    %118 = vmatpush1.msra.mxu0 0.0
    %119 = vmatprep.subr.mxu0 0.0
    %120 = vmatpush1.msra.mxu0 0.0
    %121 = vmatprep.subr.mxu0 0.0
    %122 = vmatpush1.msra.mxu0 0.0
    %123 = vmatprep.subr.mxu0 0.0
    %124 = vmatpush1.msra.mxu0 0.0
    %125 = vmatprep.subr.mxu0 0.0
    %126 = vmatpush1.msra.mxu0 0.0
    %127 = vmatprep.subr.mxu0 0.0
    %128 = vmatpush1.msra.mxu0 0.0
    %129 = vmatprep.subr.mxu0 0.0
    %130 = vmatpush1.msra.mxu0 0.0
    %131 = vmatprep.subr.mxu0 0.0
    %132 = vmatpush1.msra.mxu0 0.0
    %133 = vmatprep.subr.mxu0 0.0
    %134 = vmatpush1.msra.mxu0 0.0
    %135 = vmatprep.subr.mxu0 0.0
    %136 = vmatpush1.msra.mxu0 0.0
    %137 = vmatprep.subr.mxu0 0.0
    %138 = vmatpush1.msra.mxu0 0.0
    %139 = vmatprep.subr.mxu0 0.0
    %140 = vmatpush1.msra.mxu0 0.0
    %141 = vmatprep.subr.mxu0 0.0
    %142 = vmatpush1.msra.mxu0 0.0
    %143 = vmatprep.subr.mxu0 0.0
    %144 = vmatpush1.msra.mxu0 0.0
    %145 = vmatprep.subr.mxu0 0.0
    %146 = vmatpush1.msra.mxu0 0.0
    %147 = vmatprep.subr.mxu0 0.0
    %148 = vmatpush1.msra.mxu0 0.0
    %149 = vmatprep.subr.mxu0 0.0
    %150 = vmatpush1.msra.mxu0 0.0
    %151 = vmatprep.subr.mxu0 0.0
    %152 = vmatpush1.msra.mxu0 0.0
    %153 = vmatprep.subr.mxu0 0.0
    %154 = vmatpush1.msra.mxu0 0.0
    %155 = vmatprep.subr.mxu0 0.0
    %156 = vmatpush1.msra.mxu0 0.0
    %157 = vmatprep.subr.mxu0 0.0
    %158 = vmatpush1.msra.mxu0 0.0
    %159 = vmatprep.subr.mxu0 0.0
    %160 = vmatpush1.msra.mxu0 0.0
    %161 = vmatprep.subr.mxu0 0.0
    %162 = vmatpush1.msra.mxu0 0.0
    %163 = vmatprep.subr.mxu0 0.0
    %164 = vmatpush1.msra.mxu0 0.0
    %165 = vmatprep.mubr.f32.mxu0 0.0
    %166 = vmatmul.mubr.f32.gmra.mrb[0].mxu0 %v90
    %v167 = vpop.f32.mrb[0].mxu0
    %v168 = vadd.f32 %v86, %v167
    %v169 = vpop.f32.mrb[0].mxu0
    %170 = vmatprep.mubr.f32.mxu0 0.0
    %171 = vmatmul.mubr.f32.gmra.mrb[0].mxu0 %v93
    %v172 = vpop.f32.mrb[0].mxu0
    %v173 = vadd.f32 %v86, %v172
    %v174 = vpop.f32.mrb[0].mxu0
    %175 = vmatprep.mubr.f32.mxu0 0.0
    %176 = vmatmul.mubr.f32.gmra.mrb[0].mxu0 %v96
    %v177 = vpop.f32.mrb[0].mxu0
    %v178 = vadd.f32 %v86, %v177
    %v179 = vpop.f32.mrb[0].mxu0
    %180 = vmatprep.mubr.f32.mxu0 0.0
    %181 = vmatmul.mubr.f32.gmra.mrb[0].mxu0 %v99
    %v182 = vpop.f32.mrb[0].mxu0
    %v183 = vadd.f32 %v86, %v182
    %v184 = vpop.f32.mrb[0].mxu0
    %185 = vdwg.mxu0
    %v186 = vmax.f32 %v168, 0.0
    %v187 = vmax.f32 %v173, 0.0
    %v188 = vmax.f32 %v178, 0.0
    %v189 = vmax.f32 %v183, 0.0
    %v190 = vld [vmem:[#allocation7] sm:$0xff]
    %v191 = vld [vmem:[#allocation7 + $0x8] sm:$0xff]
    %v192 = vld [vmem:[#allocation7 + $0x10] sm:$0xff]
    %v193 = vld [vmem:[#allocation7 + $0x18] sm:$0xff]
    %v194 = vld [vmem:[#allocation7 + $0x20] sm:$0xff]
    %v195 = vld [vmem:[#allocation7 + $0x28] sm:$0xff]
    %v196 = vld [vmem:[#allocation7 + $0x30] sm:$0xff]
    %v197 = vld [vmem:[#allocation7 + $0x38] sm:$0xff]
    %v198 = vld [vmem:[#allocation7 + $0x40] sm:$0xff]
    %v199 = vld [vmem:[#allocation7 + $0x48] sm:$0xff]
    %v200 = vld [vmem:[#allocation7 + $0x50] sm:$0xff]
    %v201 = vld [vmem:[#allocation7 + $0x58] sm:$0xff]
    %v202 = vld [vmem:[#allocation7 + $0x60] sm:$0xff]
    %v203 = vld [vmem:[#allocation7 + $0x68] sm:$0xff]
    %v204 = vld [vmem:[#allocation7 + $0x70] sm:$0xff]
    %v205 = vld [vmem:[#allocation7 + $0x78] sm:$0xff]
    %v206 = vld [vmem:[%s4] sm:$0x1]
    %v208 = vlaneseq
    %v209 = vshrl.u32 %v208, 7
    %v210 = vsub.s32 0, %v209
    %v211 = vrot.slane %v206, %v210
    %213 = vmatprep.subr.mxu0 0.0
    %214 = vmatpush1.msra.mxu0 %v190
    %215 = vmatprep.subr.mxu0 0.0
    %216 = vmatpush1.msra.mxu0 %v191
    %217 = vmatprep.subr.mxu0 0.0
    %218 = vmatpush1.msra.mxu0 %v192
    %219 = vmatprep.subr.mxu0 0.0
    %220 = vmatpush1.msra.mxu0 %v193
    %221 = vmatprep.subr.mxu0 0.0
    %222 = vmatpush1.msra.mxu0 %v194
    %223 = vmatprep.subr.mxu0 0.0
    %224 = vmatpush1.msra.mxu0 %v195
    %225 = vmatprep.subr.mxu0 0.0
    %226 = vmatpush1.msra.mxu0 %v196
    %227 = vmatprep.subr.mxu0 0.0
    %228 = vmatpush1.msra.mxu0 %v197
    %229 = vmatprep.subr.mxu0 0.0
    %230 = vmatpush1.msra.mxu0 %v198
    %231 = vmatprep.subr.mxu0 0.0
    %232 = vmatpush1.msra.mxu0 %v199
    %233 = vmatprep.subr.mxu0 0.0
    %234 = vmatpush1.msra.mxu0 %v200
    %235 = vmatprep.subr.mxu0 0.0
    %236 = vmatpush1.msra.mxu0 %v201
    %237 = vmatprep.subr.mxu0 0.0
    %238 = vmatpush1.msra.mxu0 %v202
    %239 = vmatprep.subr.mxu0 0.0
    %240 = vmatpush1.msra.mxu0 %v203
    %241 = vmatprep.subr.mxu0 0.0
    %242 = vmatpush1.msra.mxu0 %v204
    %243 = vmatprep.subr.mxu0 0.0
    %244 = vmatpush1.msra.mxu0 %v205
    %245 = vmatprep.subr.mxu0 0.0
    %246 = vmatpush1.msra.mxu0 0.0
    %247 = vmatprep.subr.mxu0 0.0
    %248 = vmatpush1.msra.mxu0 0.0
    %249 = vmatprep.subr.mxu0 0.0
    %250 = vmatpush1.msra.mxu0 0.0
    %251 = vmatprep.subr.mxu0 0.0
    %252 = vmatpush1.msra.mxu0 0.0
    %253 = vmatprep.subr.mxu0 0.0
    %254 = vmatpush1.msra.mxu0 0.0
    %255 = vmatprep.subr.mxu0 0.0
    %256 = vmatpush1.msra.mxu0 0.0
    %257 = vmatprep.subr.mxu0 0.0
    %258 = vmatpush1.msra.mxu0 0.0
    %259 = vmatprep.subr.mxu0 0.0
    %260 = vmatpush1.msra.mxu0 0.0
    %261 = vmatprep.subr.mxu0 0.0
    %262 = vmatpush1.msra.mxu0 0.0
    %263 = vmatprep.subr.mxu0 0.0
    %264 = vmatpush1.msra.mxu0 0.0
    %265 = vmatprep.subr.mxu0 0.0
    %266 = vmatpush1.msra.mxu0 0.0
    %267 = vmatprep.subr.mxu0 0.0
    %268 = vmatpush1.msra.mxu0 0.0
    %269 = vmatprep.subr.mxu0 0.0
    %270 = vmatpush1.msra.mxu0 0.0
    %271 = vmatprep.subr.mxu0 0.0
    %272 = vmatpush1.msra.mxu0 0.0
    %273 = vmatprep.subr.mxu0 0.0
    %274 = vmatpush1.msra.mxu0 0.0
    %275 = vmatprep.subr.mxu0 0.0
    %276 = vmatpush1.msra.mxu0 0.0
    %277 = vmatprep.mubr.f32.mxu0 0.0
    %278 = vmatmul.mubr.f32.gmra.mrb[0].mxu0 %v186
    %v279 = vpop.f32.mrb[0].mxu0
    %v280 = vadd.f32 %v211, %v279
    %v281 = vpop.f32.mrb[0].mxu0
    %282 = vmatprep.mubr.f32.mxu0 0.0
    %283 = vmatmul.mubr.f32.gmra.mrb[0].mxu0 %v187
    %v284 = vpop.f32.mrb[0].mxu0
    %v285 = vadd.f32 %v211, %v284
    %v286 = vpop.f32.mrb[0].mxu0
    %287 = vmatprep.mubr.f32.mxu0 0.0
    %288 = vmatmul.mubr.f32.gmra.mrb[0].mxu0 %v188
    %v289 = vpop.f32.mrb[0].mxu0
    %v290 = vadd.f32 %v211, %v289
    %v291 = vpop.f32.mrb[0].mxu0
    %292 = vmatprep.mubr.f32.mxu0 0.0
    %293 = vmatmul.mubr.f32.gmra.mrb[0].mxu0 %v189
    %v294 = vpop.f32.mrb[0].mxu0
    %v295 = vadd.f32 %v211, %v294
    %v296 = vpop.f32.mrb[0].mxu0
    %297 = vdwg.mxu0
    %v298 = vmax.f32 %v280, 0.0
    %v299 = vmax.f32 %v285, 0.0
    %v300 = vmax.f32 %v290, 0.0
    %v301 = vmax.f32 %v295, 0.0
    %v302 = vld [vmem:[%s5] sm:$0x1]
    %v304 = vlaneseq
    %v305 = vshrl.u32 %v304, 7
    %v306 = vsub.s32 0, %v305
    %v307 = vrot.slane %v302, %v306
    %v309 = vmul.f32 %v298, %v307
    %v310 = vmul.f32 %v299, %v307
    %v311 = vmul.f32 %v300, %v307
    %v312 = vmul.f32 %v301, %v307
    %313 = vadd.xlane.f32.xlu0 %v309
    %v314 = vpop.xlane.xlu0 %313
    %315 = vadd.xlane.f32.xlu0 %v310
    %v316 = vpop.xlane.xlu0 %315
    %317 = vadd.xlane.f32.xlu0 %v311
    %v318 = vpop.xlane.xlu0 %317
    %319 = vadd.xlane.f32.xlu0 %v312
    %v320 = vpop.xlane.xlu0 %319
    %v321 = vld [vmem:[#allocation2] sm:$0x1]
    %v323 = vlaneseq
    %v324 = vshrl.u32 %v323, 7
    %v325 = vsub.s32 0, %v324
    %v326 = vrot.slane %v321, %v325
    %v328 = vadd.f32 %v314, %v326
    %v329 = vadd.f32 %v316, %v326
    %v330 = vadd.f32 %v318, %v326
    %v331 = vadd.f32 %v320, %v326
    %v332 = vxor.u32 %v328, 2147483648
    %v333 = vxor.u32 %v329, 2147483648
    %v334 = vxor.u32 %v330, 2147483648
    %v335 = vxor.u32 %v331, 2147483648
    %v336 = vmul.f32 %v332, 1.442695
    %v337 = vpow.pop %v336
    %v338 = vmul.f32 %v333, 1.442695
    %v339 = vpow.pop %v338
    %v340 = vmul.f32 %v334, 1.442695
    %v341 = vpow.pop %v340
    %v342 = vmul.f32 %v335, 1.442695
    %v343 = vpow.pop %v342
    %v344 = vadd.f32 %v337, 1.0
    %v345 = vadd.f32 %v339, 1.0
    %v346 = vadd.f32 %v341, 1.0
    %v347 = vadd.f32 %v343, 1.0
    %v348 = vrcp.pop %v344
    %v349 = vmul.f32 1.0, %v348
    %v350 = vrcp.pop %v345
    %v351 = vmul.f32 1.0, %v350
    %v352 = vrcp.pop %v346
    %v353 = vmul.f32 1.0, %v352
    %v354 = vrcp.pop %v347
    %v355 = vmul.f32 1.0, %v354
    %vm356 = vcmask 7168
    %357 = vst.msk [vmem:[%s7] sm:$0xff] %vm356, %v349
    %358 = vst.msk [vmem:[%s7 + $0x8] sm:$0xff] %vm356, %v351
    %359 = vst.msk [vmem:[%s7 + $0x10] sm:$0xff] %vm356, %v353
    %360 = vst.msk [vmem:[%s7 + $0x18] sm:$0xff] %vm356, %v355
    // Predicated region
    $region42: #{tpu_custom_call.1} parent=1 // pred_check
      _
    $region43: #{tpu_custom_call.1} parent=1 // pred_check_branch
      %362 = sbr.rel (0) target = $region45
    $region44: #{tpu_custom_call.1} parent=1 // pred_region
      _
    $region45: #{tpu_custom_call.1} parent=1 // pred_fallthru
      _
    // Predicated region
    $region46: #{tpu_custom_call.1} parent=1 // pred_check
      _
    $region47: #{tpu_custom_call.1} parent=1 // pred_check_branch
      %364 = sbr.rel (0) target = $region49
    $region48: #{tpu_custom_call.1} parent=1 // pred_region
      _
    $region49: #{tpu_custom_call.1} parent=1 // pred_fallthru
      _
    %365 = vsyncpa [#allocation4], 1
    %366 = vsyncpa [#allocation6], 1

</llo_original>
